<compile_context>
chip_gen: v7x
topology: tpu7x:2x2x1
jax: 0.10.0
libtpu: 0.0.40
codegen_flags: <defaults>
</compile_context>

<pallas_src>
import functools

import jax
import jax.numpy as jnp
from jax.experimental import pallas as pl
from jax.experimental.pallas import tpu as pltpu


def _round_up(x, m):
    return ((x + m - 1) // m) * m


# ------------------------------ kernel bodies ---------------------------------

def _proj_kernel_acc(x_ref, w_ref, b_ref, o_ref, acc_ref):
    """One (tm, tn) output tile; K is reduced over grid axis 2 into an f32 acc."""
    k = pl.program_id(2)

    @pl.when(k == 0)
    def _():
        acc_ref[...] = jnp.zeros_like(acc_ref)

    acc_ref[...] += jnp.dot(
        x_ref[...], w_ref[...], preferred_element_type=jnp.float32
    )

    @pl.when(k == pl.num_programs(2) - 1)
    def _():
        # Fused bias add + cast; tn % 128 == 0 so the store is lane-dense.
        o_ref[...] = (acc_ref[...] + b_ref[...].astype(jnp.float32)).astype(
            o_ref.dtype
        )


def _proj_kernel_noacc(x_ref, w_ref, b_ref, o_ref):
    """Single-K-step variant: no scratch accumulator, no init/RMW traffic."""
    o_ref[...] = (
        jnp.dot(x_ref[...], w_ref[...], preferred_element_type=jnp.float32)
        + b_ref[...].astype(jnp.float32)
    ).astype(o_ref.dtype)


# ------------------------------ host wrapper ----------------------------------

@functools.partial(
    jax.jit,
    static_argnames=("tm_pref", "tn_pref", "tk_pref", "operand_dtype", "out_dtype"),
)
def projection_forward(
    x,
    w,
    b,
    *,
    tm_pref=1024,
    tn_pref=512,
    tk_pref=1024,
    operand_dtype=jnp.bfloat16,
    out_dtype=None,
):
    """y = x @ w + b with x: (..., D), w: (D, V), b: (V,) -> (..., V)."""
    lead_dims = x.shape[:-1]
    D = x.shape[-1]
    V = w.shape[1]
    M = 1
    for d in lead_dims:
        M *= d
    out_dtype = x.dtype if out_dtype is None else out_dtype

    # ---- tile selection: multiples of (8, 128), robust to any M / V / D ----
    tm = min(tm_pref, _round_up(M, 8))
    tn = min(tn_pref, _round_up(V, 128))
    tk = min(tk_pref, _round_up(D, 128))

    # Keep >= 2 tiles on a parallel axis so both v7x TensorCores get work.
    if pl.cdiv(M, tm) == 1 and pl.cdiv(V, tn) == 1 and tn >= 256:
        tn //= 2  # still a multiple of 128

    Mp, Vp, Dp = _round_up(M, tm), _round_up(V, tn), _round_up(D, tk)
    grid = (Mp // tm, Vp // tn, Dp // tk)
    nk = grid[2]

    # ---- operands: zero-pad to tile multiples, cast matmul operands to bf16 ----
    x2 = x.reshape(M, D)
    if (Mp, Dp) != (M, D):
        x2 = jnp.pad(x2, ((0, Mp - M), (0, Dp - D)))
    wp = w
    if (Dp, Vp) != (D, V):
        wp = jnp.pad(w, ((0, Dp - D), (0, Vp - V)))
    bp = b if Vp == V else jnp.pad(b, (0, Vp - V))

    x2 = x2.astype(operand_dtype)
    wp = wp.astype(operand_dtype)
    b2 = bp.reshape(1, Vp).astype(jnp.float32)

    # ---- explicit VMEM budget for the chosen tiles (+~50% headroom) ----
    in_b = jnp.dtype(operand_dtype).itemsize
    out_b = jnp.dtype(out_dtype).itemsize
    vmem_need = (
        2 * (tm * tk + tk * tn) * in_b     # double-buffered x, W input tiles
        + 2 * tm * tn * out_b              # double-buffered output tile
        + 2 * tn * 4                       # bias tile (f32)
        + (tm * tn * 4 if nk > 1 else 0)   # f32 accumulator scratch
    )
    vmem_limit = min(max(int(vmem_need * 1.5), 4 * 1024 * 1024), 100 * 1024 * 1024)

    kernel = _proj_kernel_acc if nk > 1 else _proj_kernel_noacc
    scratch = [pltpu.VMEM((tm, tn), jnp.float32)] if nk > 1 else []

    out = pl.pallas_call(
        kernel,
        out_shape=jax.ShapeDtypeStruct((Mp, Vp), out_dtype),
        grid_spec=pltpu.PrefetchScalarGridSpec(
            num_scalar_prefetch=0,
            grid=grid,
            in_specs=[
                pl.BlockSpec((tm, tk), lambda i, j, k: (i, k)),   # x tile
                pl.BlockSpec((tk, tn), lambda i, j, k: (k, j)),   # W tile
                pl.BlockSpec((1, tn), lambda i, j, k: (0, j)),    # bias tile
            ],
            out_specs=pl.BlockSpec((tm, tn), lambda i, j, k: (i, j)),
            scratch_shapes=scratch,
        ),
        compiler_params=pltpu.CompilerParams(
            dimension_semantics=("parallel", "parallel", "arbitrary"),
            vmem_limit_bytes=vmem_limit,
        ),
    )(x2, wp, b2)

    out = out[:M, :V]
    return out.reshape(*lead_dims, V)


# ------------------------------ main -------------------------------------------

if __name__ == "__main__":
    # Shapes implied by the module: (batch, seq, d_model) -> (batch, seq, vocab).
    B, S = 2, 8
    d_model, vocab_size = 32, 512

    key = jax.random.PRNGKey(0)
    kx, kw, kb = jax.random.split(key, 3)

    x = jax.random.normal(kx, (B, S, d_model), jnp.float32)
    # Weight stored as (in_features, out_features) = W_pt.T ; same math as nn.Linear.
    w = jax.random.normal(kw, (d_model, vocab_size), jnp.float32) * 0.02
    b = jax.random.normal(kb, (vocab_size,), jnp.float32) * 0.02

    out = jax.block_until_ready(projection_forward(x, w, b))

    # Pure-JAX fp32 reference (identical to PyTorch: x @ W_pt.T + b).
    ref = x @ w + b

    assert out.shape == (B, S, vocab_size), out.shape
    # bf16 matmul operands (f32 accumulate) -> loose tolerance vs exact fp32 ref.
    err = float(jnp.max(jnp.abs(out.astype(jnp.float32) - ref)))
    assert jnp.allclose(out.astype(jnp.float32), ref, rtol=2e-2, atol=2e-2), err

    print("KERNEL_OK")
</pallas_src>

<mosaic_0001>
module attributes {stable_mosaic.version = 11 : i64} {
  func.func @_proj_kernel_noacc(%arg0: i32, %arg1: i32, %arg2: i32, %arg3: memref<16x128xbf16, #tpu.memory_space<vmem>>, %arg4: memref<128x256xbf16, #tpu.memory_space<vmem>>, %arg5: memref<1x256xf32, #tpu.memory_space<vmem>>, %arg6: memref<16x256xf32, #tpu.memory_space<vmem>>) attributes {dimension_semantics = [#tpu.dimension_semantics<parallel>, #tpu.dimension_semantics<parallel>, #tpu.dimension_semantics<arbitrary>], iteration_bounds = array<i64: 1, 2, 1>, scalar_prefetch = 0 : i64, scratch_operands = 0 : i64, tpu.core_type = #tpu.core_type<tc>, window_params = [{transform_indices = @transform_0, window_bounds = array<i64: 16, 128>}, {transform_indices = @transform_1, window_bounds = array<i64: 128, 256>}, {transform_indices = @transform_2, window_bounds = array<i64: 1, 256>}, {transform_indices = @transform_3, window_bounds = array<i64: 16, 256>}]} {
    %c0 = arith.constant 0 : index
    %c0_0 = arith.constant 0 : index
    %0 = vector.load %arg3[%c0, %c0_0] : memref<16x128xbf16, #tpu.memory_space<vmem>>, vector<16x128xbf16>
    %c0_1 = arith.constant 0 : index
    %c0_2 = arith.constant 0 : index
    %1 = vector.load %arg4[%c0_1, %c0_2] : memref<128x256xbf16, #tpu.memory_space<vmem>>, vector<128x256xbf16>
    %cst = arith.constant dense<0.000000e+00> : vector<16x256xf32>
    %2 = tpu.matmul %0, %1, %cst {dimension_numbers = #tpu.dot_dimension_numbers<[1], [0], [0], [1], [0, 0, 1, 1], [], []>} : vector<16x128xbf16>, vector<128x256xbf16>, vector<16x256xf32> -> vector<16x256xf32>
    %c0_3 = arith.constant 0 : index
    %c0_4 = arith.constant 0 : index
    %3 = vector.load %arg5[%c0_3, %c0_4] : memref<1x256xf32, #tpu.memory_space<vmem>>, vector<1x256xf32>
    %4 = vector.broadcast %3 : vector<1x256xf32> to vector<16x256xf32>
    %5 = arith.addf %2, %4 : vector<16x256xf32>
    %c0_5 = arith.constant 0 : index
    %c0_6 = arith.constant 0 : index
    %6 = vector.load %arg6[%c0_5, %c0_6] : memref<16x256xf32, #tpu.memory_space<vmem>>, vector<16x256xf32>
    tpu.vector_store %arg6[%c0_5, %c0_6], %5 {strides = array<i32>} : memref<16x256xf32, #tpu.memory_space<vmem>>, vector<16x256xf32>,
    return
  }
  func.func @transform_0(%arg0: i32, %arg1: i32, %arg2: i32) -> (i32, i32) {
    %c0_i32 = arith.constant 0 : i32
    return %arg0, %arg2 : i32, i32
  }
  func.func @transform_1(%arg0: i32, %arg1: i32, %arg2: i32) -> (i32, i32) {
    %c0_i32 = arith.constant 0 : i32
    return %arg2, %arg1 : i32, i32
  }
  func.func @transform_2(%arg0: i32, %arg1: i32, %arg2: i32) -> (i32, i32) {
    %c0_i32 = arith.constant 0 : i32
    %c0_i32_0 = arith.constant 0 : i32
    return %c0_i32, %arg1 : i32, i32
  }
  func.func @transform_3(%arg0: i32, %arg1: i32, %arg2: i32) -> (i32, i32) {
    %c0_i32 = arith.constant 0 : i32
    return %arg0, %arg1 : i32, i32
  }
}

</mosaic_0001>

<llo_original>
// kernel: projection_forward.1
$region0: #{projection_forward.1}
  #allocation0 [shape = 'u32[]', space=smem, size = 0x4, offset = 0x4, fixed_abs, tag = 'smem constant byte address 0x4 - core index']
  #allocation1 [shape = 'u32[144,128]{1,0:T(1,128)}', space=vmem, size = 0x12000, scoped, tag = 'internal scratch']
  %s0 = inlined_call_operand.vmem [shape: bf16[16,128], index: 0, kind: input, shape index: {}]
  %s1 = inlined_call_operand.vmem [shape: bf16[128,512], index: 1, kind: input, shape index: {}]
  %s2 = inlined_call_operand.vmem [shape: f32[1,512], index: 2, kind: input, shape index: {}]
  %s3 = inlined_call_operand.hbm [shape: f32[16,512], index: 3, kind: output, shape index: {}]
  %s4 = sld [smem:[#allocation0]]
  $region83: #{projection_forward.1} parent=0
    _
  %s6 = ssub.s32 1, %s4
  %s7 = scalar_select 0, %s6, %s4
  $region1: #{projection_forward.1} parent=0
    #allocation2 [shape = 'u8[131072]{0}', space=vmem, size = 0x20000, scoped, tag = 'input window, operand 1']
    #allocation3 [shape = 'u8[32768]{0}', space=vmem, size = 0x8000, scoped, tag = 'output window, operand 0']
    #allocation4 [shape = 's32[2]{0}', space=sflag, size = 0x8, scoped, tag = 'scoped memory for projection_forward.1']
    %8 = vsyncpa [#allocation4], 0
    %s9 = scalar_lea.sflag [#allocation4], 1
    %10 = vsyncpa %s9, 0
    loop: start=0, step=1, limit=4
    $region2: #{projection_forward.1} parent=1 // loop_pre_header
      _
    $region3: #{projection_forward.1} parent=1 // loop_header
      %s12 = sphi 0, %s16
      %p13 = scmp.ge.s32.totalorder %s12, 4
      %s19 = sphi 0, %s38
      %s20 = sphi 0, %s34
      %s21 = sphi 0, %s30
      %s22 = sphi 0, %s19
      %s23 = sphi 0, %s20
      %s24 = sphi 0, %s21
      %s25 = sphi 0, %s22
      %s26 = sphi 0, %s23
      %s27 = sphi 0, %s24
      %s43 = sphi 0, %s45
      %s46 = sphi 0, %s43
      %s47 = sphi 0, %s46
      %s63 = sphi 0, %s47
      %s71 = sphi 0, %s73
      %s74 = sphi 0, %s71
      %s75 = sphi 0, %s74
      %s91 = sphi 0, %s75
      %s97 = sphi 0, %s99
      %s100 = sphi 0, %s97
      %s101 = sphi 0, %s100
      %s117 = sphi 0, %s101
      %s125 = sphi 0, %s127
      %s128 = sphi 0, %s125
      %s129 = sphi 0, %s128
      %s145 = sphi 0, %s129
    $region4: #{projection_forward.1} parent=1 // loop_header_branch
      %15 = sbr.rel (%p13) target = $region8
    $region5: #{projection_forward.1} parent=1 // loop_body
      %s17 = ssub.s32 %s12, 1
      %s18 = ssub.s32 %s12, 2
      %s28 = sadd.s32 1, %s21
      %p29 = scmp.ge.s32.totalorder %s28, 1
      %s30 = scalar_select %p29, 0, %s28
      %s31 = sadd.s32 1, %s20
      %s32 = scalar_select %p29, %s31, %s20
      %p33 = scmp.ge.s32.totalorder %s32, 2
      %s34 = scalar_select %p33, 0, %s32
      %s35 = sadd.s32 1, %s19
      %s36 = scalar_select %p33, %s35, %s19
      %p37 = scmp.ge.s32.totalorder %s36, 1
      %s38 = scalar_select %p37, 0, %s36
      %s39 = ssub.s32 %s19, %s38
      %s40 = ssub.s32 %s21, %s30
      %s41 = sor.u32 %s39, %s40
      %p42 = scmp.eq.s32.totalorder %s41, 0
      %s44 = sadd.s32 %s43, 1
      %s45 = scalar_select %p42, %s43, %s44
      %p48 = pneg %p42
      %p49 = scmp.eq.s32.totalorder %s12, 1
      %p50 = por %p48, %p49
      %p51 = scmp.ne.s32.totalorder %s43, %s46
      %p52 = scmp.eq.s32.totalorder %s12, 0
      %p53 = por %p51, %p52
      %p54 = scmp.ne.s32.totalorder %s43, %s46
      %p55 = scmp.eq.s32.totalorder %s17, 1
      %p56 = por %p54, %p55
      %p57 = scmp.ne.s32.totalorder %s46, %s47
      %p58 = scmp.eq.s32.totalorder %s17, 0
      %p59 = por %p57, %p58
      %p60 = scmp.ne.s32.totalorder %s46, %s47
      %p61 = scmp.eq.s32.totalorder %s18, 1
      %p62 = por %p60, %p61
      %p64 = scmp.ne.s32.totalorder %s47, %s63
      %p65 = scmp.eq.s32.totalorder %s18, 0
      %p66 = por %p64, %p65
      %s67 = ssub.s32 %s21, %s30
      %s68 = ssub.s32 %s20, %s34
      %s69 = sor.u32 %s67, %s68
      %p70 = scmp.eq.s32.totalorder %s69, 0
      %s72 = sadd.s32 %s71, 1
      %s73 = scalar_select %p70, %s71, %s72
      %p76 = pneg %p70
      %p77 = scmp.eq.s32.totalorder %s12, 1
      %p78 = por %p76, %p77
      %p79 = scmp.ne.s32.totalorder %s71, %s74
      %p80 = scmp.eq.s32.totalorder %s12, 0
      %p81 = por %p79, %p80
      %p82 = scmp.ne.s32.totalorder %s71, %s74
      %p83 = scmp.eq.s32.totalorder %s17, 1
      %p84 = por %p82, %p83
      %p85 = scmp.ne.s32.totalorder %s74, %s75
      %p86 = scmp.eq.s32.totalorder %s17, 0
      %p87 = por %p85, %p86
      %p88 = scmp.ne.s32.totalorder %s74, %s75
      %p89 = scmp.eq.s32.totalorder %s18, 1
      %p90 = por %p88, %p89
      %p92 = scmp.ne.s32.totalorder %s75, %s91
      %p93 = scmp.eq.s32.totalorder %s18, 0
      %p94 = por %p92, %p93
      %s95 = ssub.s32 %s20, %s34
      %p96 = scmp.eq.s32.totalorder %s95, 0
      %s98 = sadd.s32 %s97, 1
      %s99 = scalar_select %p96, %s97, %s98
      %p102 = pneg %p96
      %p103 = scmp.eq.s32.totalorder %s12, 1
      %p104 = por %p102, %p103
      %p105 = scmp.ne.s32.totalorder %s97, %s100
      %p106 = scmp.eq.s32.totalorder %s12, 0
      %p107 = por %p105, %p106
      %p108 = scmp.ne.s32.totalorder %s97, %s100
      %p109 = scmp.eq.s32.totalorder %s17, 1
      %p110 = por %p108, %p109
      %p111 = scmp.ne.s32.totalorder %s100, %s101
      %p112 = scmp.eq.s32.totalorder %s17, 0
      %p113 = por %p111, %p112
      %p114 = scmp.ne.s32.totalorder %s100, %s101
      %p115 = scmp.eq.s32.totalorder %s18, 1
      %p116 = por %p114, %p115
      %p118 = scmp.ne.s32.totalorder %s101, %s117
      %p119 = scmp.eq.s32.totalorder %s18, 0
      %p120 = por %p118, %p119
      %s121 = ssub.s32 %s19, %s38
      %s122 = ssub.s32 %s20, %s34
      %s123 = sor.u32 %s121, %s122
      %p124 = scmp.eq.s32.totalorder %s123, 0
      %s126 = sadd.s32 %s125, 1
      %s127 = scalar_select %p124, %s125, %s126
      %p130 = pneg %p124
      %p131 = scmp.eq.s32.totalorder %s12, 1
      %p132 = por %p130, %p131
      %p133 = scmp.ne.s32.totalorder %s125, %s128
      %p134 = scmp.eq.s32.totalorder %s12, 0
      %p135 = por %p133, %p134
      %p136 = scmp.ne.s32.totalorder %s125, %s128
      %p137 = scmp.eq.s32.totalorder %s17, 1
      %p138 = por %p136, %p137
      %p139 = scmp.ne.s32.totalorder %s128, %s129
      %p140 = scmp.eq.s32.totalorder %s17, 0
      %p141 = por %p139, %p140
      %p142 = scmp.ne.s32.totalorder %s128, %s129
      %p143 = scmp.eq.s32.totalorder %s18, 1
      %p144 = por %p142, %p143
      %p146 = scmp.ne.s32.totalorder %s129, %s145
      %p147 = scmp.eq.s32.totalorder %s18, 0
      %p148 = por %p146, %p147
      %p149 = scmp.le.s32.totalorder 1, %s12
      %p150 = scmp.lt.s32.totalorder %s12, 3
      %p151 = pnand %p149, %p150
      %p152 = pneg %p151
      // Predicated region
      $region9: #{projection_forward.1} parent=5 // pred_check
        _
      $region10: #{projection_forward.1} parent=5 // pred_check_branch
        %154 = sbr.rel (%p151) target = $region12
      $region11: #{projection_forward.1} parent=5 // pred_region
        %s155 = ssub.s32 %s12, 1
        // Predicated region
        $region13: #{projection_forward.1} parent=11 // pred_check
          %p156 = pneg %p59
        $region14: #{projection_forward.1} parent=11 // pred_check_branch
          %158 = sbr.rel (%p156) target = $region16
        $region15: #{projection_forward.1} parent=11 // pred_region
          %s159 = smul.u32 2, %s22
          %p160 = scmp.lt.s32.totalorder %s159, 1
          %s161 = scalar_select %p160, %s159, 1
          %p162 = scmp.lt.s32.totalorder %s24, 0
          %s163 = scalar_select %p162, %s24, 0
          %s164 = sadd.s32 %s163, %s161
          %s165 = smul.addr %s164, 4
          %s166 = scalar_lea.vmem %s0, %s165
          %s167 = smul.u32 2, %s22
        $region16: #{projection_forward.1} parent=11 // pred_fallthru
          _
      $region12: #{projection_forward.1} parent=5 // pred_fallthru
        _
      %p168 = scmp.lt.s32.totalorder %s12, 2
      // Predicated region
      $region17: #{projection_forward.1} parent=5 // pred_check
        %p169 = pneg %p168
      $region18: #{projection_forward.1} parent=5 // pred_check_branch
        %171 = sbr.rel (%p169) target = $region20
      $region19: #{projection_forward.1} parent=5 // pred_region
        // Predicated region
        $region21: #{projection_forward.1} parent=19 // pred_check
          %p172 = pneg %p81
        $region22: #{projection_forward.1} parent=19 // pred_check_branch
          %174 = sbr.rel (%p172) target = $region24
        $region23: #{projection_forward.1} parent=19 // pred_region
          %s175 = sand.u32 %s71, 1
          %s176 = sand.u32 %s71, 1
          %s177 = smul.addr %s176, 128
          %s178 = scalar_lea.vmem [#allocation2], %s177
          %s179 = smul.u32 16, %s21
          %s180 = smul.u32 2, %s20
          %s181 = smul.addr %s179, 4
          %s182 = sadd.s32 %s180, %s181
          %s183 = smul.addr %s182, 4
          %s184 = scalar_lea.vmem %s1, %s183
          // Predicated region
          $region25: #{projection_forward.1} parent=23 // pred_check
            _
          $region26: #{projection_forward.1} parent=23 // pred_check_branch
            %186 = sbr.rel (0) target = $region28
          $region27: #{projection_forward.1} parent=23 // pred_region
            // Predicated region
            $region29: #{projection_forward.1} parent=27 // pred_check
              _
            $region30: #{projection_forward.1} parent=27 // pred_check_branch
              %188 = sbr.rel (0) target = $region32
            $region31: #{projection_forward.1} parent=27 // pred_region
              // Predicated region
              $region44: #{projection_forward.1} parent=31 // pred_check
                _
              $region45: #{projection_forward.1} parent=31 // pred_check_branch
                %233 = sbr.rel (0) target = $region47
              $region46: #{projection_forward.1} parent=31 // pred_region
                loop: start=0, step=1, limit=1
                $region48: #{projection_forward.1} parent=46 // loop_pre_header
                  _
                $region49: #{projection_forward.1} parent=46 // loop_header
                  %s235 = sphi 0, %s239
                  %p236 = scmp.ge.s32.totalorder %s235, 1
                  %s240 = sphi %s184, %s184
                  %s241 = sphi %s178, %s178
                $region50: #{projection_forward.1} parent=46 // loop_header_branch
                  %238 = sbr.rel (%p236) target = $region54
                $region51: #{projection_forward.1} parent=46 // loop_body
                  %v242 = vld [vmem:[%s240] sm:$0xff]
                  %243 = vst [vmem:[%s241] sm:$0xff] %v242
                  %v244 = vld [vmem:[%s240 + $0x10] sm:$0xff]
                  %245 = vst [vmem:[%s241 + $0x8] sm:$0xff] %v244
                  %v246 = vld [vmem:[%s240 + $0x20] sm:$0xff]
                  %247 = vst [vmem:[%s241 + $0x10] sm:$0xff] %v246
                  %v248 = vld [vmem:[%s240 + $0x30] sm:$0xff]
                  %249 = vst [vmem:[%s241 + $0x18] sm:$0xff] %v248
                  %v250 = vld [vmem:[%s240 + $0x40] sm:$0xff]
                  %251 = vst [vmem:[%s241 + $0x20] sm:$0xff] %v250
                  %v252 = vld [vmem:[%s240 + $0x50] sm:$0xff]
                  %253 = vst [vmem:[%s241 + $0x28] sm:$0xff] %v252
                  %v254 = vld [vmem:[%s240 + $0x60] sm:$0xff]
                  %255 = vst [vmem:[%s241 + $0x30] sm:$0xff] %v254
                  %v256 = vld [vmem:[%s240 + $0x70] sm:$0xff]
                  %257 = vst [vmem:[%s241 + $0x38] sm:$0xff] %v256
                  %v258 = vld [vmem:[%s240 + $0x80] sm:$0xff]
                  %259 = vst [vmem:[%s241 + $0x40] sm:$0xff] %v258
                  %v260 = vld [vmem:[%s240 + $0x90] sm:$0xff]
                  %261 = vst [vmem:[%s241 + $0x48] sm:$0xff] %v260
                  %v262 = vld [vmem:[%s240 + $0xa0] sm:$0xff]
                  %263 = vst [vmem:[%s241 + $0x50] sm:$0xff] %v262
                  %v264 = vld [vmem:[%s240 + $0xb0] sm:$0xff]
                  %265 = vst [vmem:[%s241 + $0x58] sm:$0xff] %v264
                  %v266 = vld [vmem:[%s240 + $0xc0] sm:$0xff]
                  %267 = vst [vmem:[%s241 + $0x60] sm:$0xff] %v266
                  %v268 = vld [vmem:[%s240 + $0xd0] sm:$0xff]
                  %269 = vst [vmem:[%s241 + $0x68] sm:$0xff] %v268
                  %v270 = vld [vmem:[%s240 + $0xe0] sm:$0xff]
                  %271 = vst [vmem:[%s241 + $0x70] sm:$0xff] %v270
                  %v272 = vld [vmem:[%s240 + $0xf0] sm:$0xff]
                  %273 = vst [vmem:[%s241 + $0x78] sm:$0xff] %v272
                $region52: #{projection_forward.1} parent=46 // loop_footer
                  %s239 = sadd.s32 1, %s235
                $region53: #{projection_forward.1} parent=46 // loop_footer_branch
                  %234 = sbr.rel target = $region49
                $region54: #{projection_forward.1} parent=46 // loop_exit
                  _
              $region47: #{projection_forward.1} parent=31 // pred_fallthru
                _
              // Predicated region
              $region55: #{projection_forward.1} parent=31 // pred_check
                _
              $region56: #{projection_forward.1} parent=31 // pred_check_branch
                %275 = sbr.rel target = $region58
              $region57: #{projection_forward.1} parent=31 // pred_region
                _
              $region58: #{projection_forward.1} parent=31 // pred_fallthru
                _
            $region32: #{projection_forward.1} parent=27 // pred_fallthru
              _
            // Predicated region
            $region33: #{projection_forward.1} parent=27 // pred_check
              _
            $region34: #{projection_forward.1} parent=27 // pred_check_branch
              %190 = sbr.rel target = $region36
            $region35: #{projection_forward.1} parent=27 // pred_region
              loop: start=0, step=1, limit=1
              $region37: #{projection_forward.1} parent=35 // loop_pre_header
                _
              $region38: #{projection_forward.1} parent=35 // loop_header
                %s193 = sphi 0, %s197
                %p194 = scmp.ge.s32.totalorder %s193, 1
                %s198 = sphi %s184, %s184
                %s199 = sphi %s178, %s178
              $region39: #{projection_forward.1} parent=35 // loop_header_branch
                %196 = sbr.rel (%p194) target = $region43
              $region40: #{projection_forward.1} parent=35 // loop_body
                %v200 = vld [vmem:[%s198] sm:$0xff]
                %201 = vst [vmem:[%s199] sm:$0xff] %v200
                %v202 = vld [vmem:[%s198 + $0x10] sm:$0xff]
                %203 = vst [vmem:[%s199 + $0x8] sm:$0xff] %v202
                %v204 = vld [vmem:[%s198 + $0x20] sm:$0xff]
                %205 = vst [vmem:[%s199 + $0x10] sm:$0xff] %v204
                %v206 = vld [vmem:[%s198 + $0x30] sm:$0xff]
                %207 = vst [vmem:[%s199 + $0x18] sm:$0xff] %v206
                %v208 = vld [vmem:[%s198 + $0x40] sm:$0xff]
                %209 = vst [vmem:[%s199 + $0x20] sm:$0xff] %v208
                %v210 = vld [vmem:[%s198 + $0x50] sm:$0xff]
                %211 = vst [vmem:[%s199 + $0x28] sm:$0xff] %v210
                %v212 = vld [vmem:[%s198 + $0x60] sm:$0xff]
                %213 = vst [vmem:[%s199 + $0x30] sm:$0xff] %v212
                %v214 = vld [vmem:[%s198 + $0x70] sm:$0xff]
                %215 = vst [vmem:[%s199 + $0x38] sm:$0xff] %v214
                %v216 = vld [vmem:[%s198 + $0x80] sm:$0xff]
                %217 = vst [vmem:[%s199 + $0x40] sm:$0xff] %v216
                %v218 = vld [vmem:[%s198 + $0x90] sm:$0xff]
                %219 = vst [vmem:[%s199 + $0x48] sm:$0xff] %v218
                %v220 = vld [vmem:[%s198 + $0xa0] sm:$0xff]
                %221 = vst [vmem:[%s199 + $0x50] sm:$0xff] %v220
                %v222 = vld [vmem:[%s198 + $0xb0] sm:$0xff]
                %223 = vst [vmem:[%s199 + $0x58] sm:$0xff] %v222
                %v224 = vld [vmem:[%s198 + $0xc0] sm:$0xff]
                %225 = vst [vmem:[%s199 + $0x60] sm:$0xff] %v224
                %v226 = vld [vmem:[%s198 + $0xd0] sm:$0xff]
                %227 = vst [vmem:[%s199 + $0x68] sm:$0xff] %v226
                %v228 = vld [vmem:[%s198 + $0xe0] sm:$0xff]
                %229 = vst [vmem:[%s199 + $0x70] sm:$0xff] %v228
                %v230 = vld [vmem:[%s198 + $0xf0] sm:$0xff]
                %231 = vst [vmem:[%s199 + $0x78] sm:$0xff] %v230
              $region41: #{projection_forward.1} parent=35 // loop_footer
                %s197 = sadd.s32 1, %s193
              $region42: #{projection_forward.1} parent=35 // loop_footer_branch
                %192 = sbr.rel target = $region38
              $region43: #{projection_forward.1} parent=35 // loop_exit
                _
            $region36: #{projection_forward.1} parent=27 // pred_fallthru
              _
          $region28: #{projection_forward.1} parent=23 // pred_fallthru
            _
          %276 = vnop
        $region24: #{projection_forward.1} parent=19 // pred_fallthru
          _
        // Predicated region
        $region59: #{projection_forward.1} parent=19 // pred_check
          %p277 = pneg %p107
        $region60: #{projection_forward.1} parent=19 // pred_check_branch
          %279 = sbr.rel (%p277) target = $region62
        $region61: #{projection_forward.1} parent=19 // pred_region
          %s280 = smul.u32 2, %s20
          %p281 = scmp.lt.s32.totalorder %s280, 3
          %s282 = scalar_select %p281, %s280, 3
          %s283 = scalar_lea.vmem %s2, %s282
          %s284 = smul.u32 2, %s20
        $region62: #{projection_forward.1} parent=19 // pred_fallthru
          _
      $region20: #{projection_forward.1} parent=5 // pred_fallthru
        _
      %p285 = scmp.le.s32.totalorder 1, %s12
      %p286 = scmp.lt.s32.totalorder %s12, 3
      %p287 = pnand %p285, %p286
      %p288 = pneg %p287
      // Predicated region
      $region63: #{projection_forward.1} parent=5 // pred_check
        _
      $region64: #{projection_forward.1} parent=5 // pred_check_branch
        %290 = sbr.rel (%p287) target = $region66
      $region65: #{projection_forward.1} parent=5 // pred_region
        %s291 = ssub.s32 %s12, 1
        %s292 = sand.u32 %s74, 1
        %s293 = sand.u32 %s74, 1
        %s294 = smul.addr %s293, 128
        %s295 = scalar_lea.vmem [#allocation2], %s294
        // Predicated region
        $region67: #{projection_forward.1} parent=65 // pred_check
          %p296 = pneg %p87
        $region68: #{projection_forward.1} parent=65 // pred_check_branch
          %298 = sbr.rel (%p296) target = $region70
        $region69: #{projection_forward.1} parent=65 // pred_region
          _
        $region70: #{projection_forward.1} parent=65 // pred_fallthru
          _
        %s299 = smul.u32 2, %s22
        %p300 = scmp.lt.s32.totalorder %s299, 1
        %s301 = scalar_select %p300, %s299, 1
        %p302 = scmp.lt.s32.totalorder %s24, 0
        %s303 = scalar_select %p302, %s24, 0
        %s304 = sadd.s32 %s303, %s301
        %s305 = smul.addr %s304, 4
        %s306 = scalar_lea.vmem %s0, %s305
        %p307 = pneg %p59
        %p308 = pneg %p56
        %s309 = sand.u32 %s74, 1
        %s310 = sand.u32 %s74, 1
        %s311 = smul.addr %s310, 128
        %s312 = scalar_lea.vmem [#allocation2], %s311
        %p313 = pneg %p87
        %p314 = pneg %p84
        %s315 = smul.u32 2, %s23
        %p316 = scmp.lt.s32.totalorder %s315, 3
        %s317 = scalar_select %p316, %s315, 3
        %s318 = scalar_lea.vmem %s2, %s317
        %p319 = pneg %p113
        %p320 = pneg %p110
        %p321 = pneg %p141
        %p322 = pneg %p138
        %s323 = sand.u32 %s128, 1
        %s324 = scalar_lea.sflag [#allocation4], %s323
        %s325 = sand.u32 %s128, 1
        %s326 = smul.addr %s325, 32
        %s327 = scalar_lea.vmem [#allocation3], %s326
        %s328 = smul.u32 2, %s22
        %p329 = scmp.lt.s32.totalorder %s328, 1
        %s330 = scalar_select %p329, %s328, 1
        %p331 = scmp.lt.s32.totalorder %s24, 0
        %s332 = scalar_select %p331, %s24, 0
        %s333 = sadd.s32 %s332, %s330
        %s334 = smul.addr %s333, 4
        %s335 = scalar_lea.vmem %s0, %s334
        %s336 = smul.u32 2, %s22
        %s337 = smul.u32 16, %s24
        %s338 = smul.u32 2, %s23
        %s339 = smul.u32 2, %s23
        %p340 = scmp.lt.s32.totalorder %s339, 3
        %s341 = scalar_select %p340, %s339, 3
        %s342 = scalar_lea.vmem %s2, %s341
        %s343 = smul.u32 2, %s23
        %s344 = smul.u32 2, %s22
        %s345 = smul.u32 2, %s23
        %v347 = vld [vmem:[%s335] sm:$0xf]
        %v348 = vld [vmem:[%s335 + $0x4] sm:$0xf]
        %v349 = vld [vmem:[%s295] sm:$0xff]
        %v350 = vld [vmem:[%s295 + $0x8] sm:$0xff]
        %v351 = vld [vmem:[%s295 + $0x10] sm:$0xff]
        %v352 = vld [vmem:[%s295 + $0x18] sm:$0xff]
        %v353 = vld [vmem:[%s295 + $0x20] sm:$0xff]
        %v354 = vld [vmem:[%s295 + $0x28] sm:$0xff]
        %v355 = vld [vmem:[%s295 + $0x30] sm:$0xff]
        %v356 = vld [vmem:[%s295 + $0x38] sm:$0xff]
        %v357 = vld [vmem:[%s295 + $0x40] sm:$0xff]
        %v358 = vld [vmem:[%s295 + $0x48] sm:$0xff]
        %v359 = vld [vmem:[%s295 + $0x50] sm:$0xff]
        %v360 = vld [vmem:[%s295 + $0x58] sm:$0xff]
        %v361 = vld [vmem:[%s295 + $0x60] sm:$0xff]
        %v362 = vld [vmem:[%s295 + $0x68] sm:$0xff]
        %v363 = vld [vmem:[%s295 + $0x70] sm:$0xff]
        %v364 = vld [vmem:[%s295 + $0x78] sm:$0xff]
        %v365 = vld [vmem:[%s342] sm:$0x3]
        %v367 = vlaneseq
        %v368 = vshrl.u32 %v367, 7
        %v369 = vsub.s32 0, %v368
        %v370 = vrot.slane %v365, %v369
        %v371 = vlaneseq
        %v372 = vshrl.u32 %v371, 7
        %v373 = vsub.s32 1, %v372
        %v374 = vrot.slane %v365, %v373
        %v379 = vunpack.c.l.b16 %v347
        %v380 = vunpack.c.l.b16 %v348
        %v381 = vpack.c.b16 %v380, %v379
        %v399 = vunpack.c.l.b16 %v349
        %v400 = vunpack.c.h.b16 %v349
        %v401 = vunpack.c.l.b16 %v350
        %v402 = vunpack.c.h.b16 %v350
        %v403 = vunpack.c.l.b16 %v351
        %v404 = vunpack.c.h.b16 %v351
        %v405 = vunpack.c.l.b16 %v352
        %v406 = vunpack.c.h.b16 %v352
        %v407 = vunpack.c.l.b16 %v353
        %v408 = vunpack.c.h.b16 %v353
        %v409 = vunpack.c.l.b16 %v354
        %v410 = vunpack.c.h.b16 %v354
        %v411 = vunpack.c.l.b16 %v355
        %v412 = vunpack.c.h.b16 %v355
        %v413 = vunpack.c.l.b16 %v356
        %v414 = vunpack.c.h.b16 %v356
        %v415 = vunpack.c.l.b16 %v357
        %v416 = vunpack.c.h.b16 %v357
        %v417 = vunpack.c.l.b16 %v358
        %v418 = vunpack.c.h.b16 %v358
        %v419 = vunpack.c.l.b16 %v359
        %v420 = vunpack.c.h.b16 %v359
        %v421 = vunpack.c.l.b16 %v360
        %v422 = vunpack.c.h.b16 %v360
        %v423 = vunpack.c.l.b16 %v361
        %v424 = vunpack.c.h.b16 %v361
        %v425 = vunpack.c.l.b16 %v362
        %v426 = vunpack.c.h.b16 %v362
        %v427 = vunpack.c.l.b16 %v363
        %v428 = vunpack.c.h.b16 %v363
        %v429 = vunpack.c.l.b16 %v364
        %v430 = vunpack.c.h.b16 %v364
        %v431 = vpack.c.b16 %v401, %v399
        %v432 = vpack.c.b16 %v402, %v400
        %v433 = vpack.c.b16 %v405, %v403
        %v434 = vpack.c.b16 %v406, %v404
        %v435 = vpack.c.b16 %v409, %v407
        %v436 = vpack.c.b16 %v410, %v408
        %v437 = vpack.c.b16 %v413, %v411
        %v438 = vpack.c.b16 %v414, %v412
        %v439 = vpack.c.b16 %v417, %v415
        %v440 = vpack.c.b16 %v418, %v416
        %v441 = vpack.c.b16 %v421, %v419
        %v442 = vpack.c.b16 %v422, %v420
        %v443 = vpack.c.b16 %v425, %v423
        %v444 = vpack.c.b16 %v426, %v424
        %v445 = vpack.c.b16 %v429, %v427
        %v446 = vpack.c.b16 %v430, %v428
        %463 = vmatprep.subr.bf16.mxu0 %v432
        %464 = vmatpush1.bf16.msra.mxu0 %v431
        %465 = vmatprep.subr.bf16.mxu0 %v434
        %466 = vmatpush1.bf16.msra.mxu0 %v433
        %467 = vmatprep.subr.bf16.mxu0 %v436
        %468 = vmatpush1.bf16.msra.mxu0 %v435
        %469 = vmatprep.subr.bf16.mxu0 %v438
        %470 = vmatpush1.bf16.msra.mxu0 %v437
        %471 = vmatprep.subr.bf16.mxu0 %v440
        %472 = vmatpush1.bf16.msra.mxu0 %v439
        %473 = vmatprep.subr.bf16.mxu0 %v442
        %474 = vmatpush1.bf16.msra.mxu0 %v441
        %475 = vmatprep.subr.bf16.mxu0 %v444
        %476 = vmatpush1.bf16.msra.mxu0 %v443
        %477 = vmatprep.subr.bf16.mxu0 %v446
        %478 = vmatpush1.bf16.msra.mxu0 %v445
        %479 = vmatprep.subr.bf16.mxu0 0
        %480 = vmatpush1.bf16.msra.mxu0 0
        %481 = vmatprep.subr.bf16.mxu0 0
        %482 = vmatpush1.bf16.msra.mxu0 0
        %483 = vmatprep.subr.bf16.mxu0 0
        %484 = vmatpush1.bf16.msra.mxu0 0
        %485 = vmatprep.subr.bf16.mxu0 0
        %486 = vmatpush1.bf16.msra.mxu0 0
        %487 = vmatprep.subr.bf16.mxu0 0
        %488 = vmatpush1.bf16.msra.mxu0 0
        %489 = vmatprep.subr.bf16.mxu0 0
        %490 = vmatpush1.bf16.msra.mxu0 0
        %491 = vmatprep.subr.bf16.mxu0 0
        %492 = vmatpush1.bf16.msra.mxu0 0
        %493 = vmatprep.subr.bf16.mxu0 0
        %494 = vmatpush1.bf16.msra.mxu0 0
        %495 = vmatprep.mubr.bf16.mxu0 0
        %496 = vmatmul.mubr.bf16.gmra.mrb[0].mxu0 %v381
        %v497 = vpop.f32.mrb[0].mxu0
        %v498 = vadd.f32 %v370, %v497
        %v499 = vpop.f32.mrb[0].mxu0
        %v500 = vadd.f32 %v374, %v499
        %v501 = vpop.f32.mrb[0].mxu0
        %v502 = vadd.f32 %v370, %v501
        %v503 = vpop.f32.mrb[0].mxu0
        %v504 = vadd.f32 %v374, %v503
        %505 = vdwg.mxu0
        %506 = vst [vmem:[%s327] sm:$0xff] %v498
        %507 = vst [vmem:[%s327 + $0x8] sm:$0xff] %v500
        %508 = vst [vmem:[%s327 + $0x10] sm:$0xff] %v502
        %509 = vst [vmem:[%s327 + $0x18] sm:$0xff] %v504
        %s510 = sand.u32 %s128, 1
        %s511 = scalar_lea.sflag [#allocation4], %s510
        %s512 = sand.u32 %s128, 1
        %s513 = smul.addr %s512, 32
        %s514 = scalar_lea.vmem [#allocation3], %s513
        // Predicated region
        $region71: #{projection_forward.1} parent=65 // pred_check
          %p515 = pneg %p138
        $region72: #{projection_forward.1} parent=65 // pred_check_branch
          %517 = sbr.rel (%p515) target = $region74
        $region73: #{projection_forward.1} parent=65 // pred_region
          %s518 = smul.u32 2, %s22
          %s519 = smul.u32 2, %s23
          %s521 = ssub.s32 512, 512
          %522 = vsyncadd %s511, %s521
          %s523 = smul.addr %s518, 4
          %s524 = sadd.s32 %s519, %s523
          %s525 = smul.addr %s524, 128
          %s526 = scalar_lea.hbm %s3, %s525
          %s527 = sshll.u32 %s514, 4
          %s528 = int_to_ptr.vmem [resolvable:$true] %s527
          %533 = dma.vmem_to_hbm [thread:$0]  %s528, 512, %s526, %s511, 256, 512, 16
        $region74: #{projection_forward.1} parent=65 // pred_fallthru
          _
      $region66: #{projection_forward.1} parent=5 // pred_fallthru
        _
      %p534 = scmp.le.s32.totalorder 2, %s12
      // Predicated region
      $region75: #{projection_forward.1} parent=5 // pred_check
        %p535 = pneg %p534
      $region76: #{projection_forward.1} parent=5 // pred_check_branch
        %537 = sbr.rel (%p535) target = $region78
      $region77: #{projection_forward.1} parent=5 // pred_region
        %s538 = ssub.s32 %s12, 2
        // Predicated region
        $region79: #{projection_forward.1} parent=77 // pred_check
          %p539 = pneg %p144
        $region80: #{projection_forward.1} parent=77 // pred_check_branch
          %541 = sbr.rel (%p539) target = $region82
        $region81: #{projection_forward.1} parent=77 // pred_region
          %s542 = sand.u32 %s129, 1
          %s543 = scalar_lea.sflag [#allocation4], %s542
          %s544 = sand.u32 %s129, 1
          %s545 = smul.addr %s544, 32
          %s546 = scalar_lea.vmem [#allocation3], %s545
          %547 = dma.done %s543, 512
        $region82: #{projection_forward.1} parent=77 // pred_fallthru
          _
      $region78: #{projection_forward.1} parent=5 // pred_fallthru
        _
    $region6: #{projection_forward.1} parent=1 // loop_footer
      %s16 = sadd.s32 1, %s12
    $region7: #{projection_forward.1} parent=1 // loop_footer_branch
      %11 = sbr.rel target = $region3
    $region8: #{projection_forward.1} parent=1 // loop_exit
      _
    %548 = vsyncpa [#allocation4], 1
    %s549 = scalar_lea.sflag [#allocation4], 1
    %550 = vsyncpa %s549, 1

</llo_original>
